<compile_context>
chip_gen: v7x
topology: tpu7x:2x2x1
jax: 0.10.0
libtpu: 0.0.40
codegen_flags: <defaults>
</compile_context>

<pallas_src>
import jax
import jax.numpy as jnp
from jax.experimental import pallas as pl
from jax.experimental.pallas import tpu as pltpu


# ---------------------------------------------------------------------------
# Kernel body
# ---------------------------------------------------------------------------
def _mask_softmax_kernel(x_ref, mask_ref, o_ref):
    # x_ref: (bb, rows, S) score tile; mask_ref: (bb, 1, S) additive key mask.
    x = x_ref[...].astype(jnp.float32)
    m = mask_ref[...].astype(jnp.float32)
    s = x + m                                    # mask broadcasts over the row axis
    s_max = jnp.max(s, axis=-1, keepdims=True)   # numerically stable softmax
    e = jnp.exp(s - s_max)
    denom = jnp.sum(e, axis=-1, keepdims=True)
    # Exact per-row reciprocal (negligible cost; avoids ~1e-3 row-sum error of
    # the approx EUP path flagged in review).
    o_ref[...] = (e * (1.0 / denom)).astype(o_ref.dtype)


# ---------------------------------------------------------------------------
# Tiling heuristics
# ---------------------------------------------------------------------------
_VMEM_ELEM_BUDGET_BYTES = 36 * 1024 * 1024   # live-VMEM target used to size a tile
_VMEM_LIMIT_FLOOR = 48 * 1024 * 1024         # scoped-VMEM request (>= default on all gens)
_VMEM_PHYS_CAP = 64 * 1024 * 1024            # v7x per-TC physical VMEM; never ask above


def _divisors(n):
    ds = set()
    i = 1
    while i * i <= n:
        if n % i == 0:
            ds.add(i)
            ds.add(n // i)
        i += 1
    return sorted(ds)


def _sublane_multiple(itemsize):
    # f32 -> 8, bf16/fp16 -> 16, int8/fp8 -> 32 (sublane packing).
    return {4: 8, 2: 16, 1: 32}.get(itemsize, 8)


def _choose_blocks(B, HS, S, itemsize):
    """Pick (batch_block bb, row_block rows_b) for the (B, H*S, S) view.

    Per-element live VMEM ~= 2*itemsize (double-buffered input)
                           + 2*itemsize (double-buffered output)
                           + 3*4        (f32 intermediates of the elementwise chain)
    Sized against ~36 MiB so the 48 MiB scoped-VMEM request always has slack.
    Result: ~5.4 MiB f32 / ~3.8 MiB bf16 input tiles (>= 4 MiB of in+out HBM
    traffic per step), keeping per-step pipeline overhead at ~5-13%.
    """
    sub = _sublane_multiple(itemsize)
    bytes_per_elem = 4 * itemsize + 3 * 4
    target_elems = _VMEM_ELEM_BUDGET_BYTES // bytes_per_elem
    max_rows = max(1, target_elems // S)

    if HS <= max_rows:
        # Short-S path: a whole batch element's (H*S, S) slab fits; fold
        # several batch elements per block (any divisor of B, not just powers
        # of two). Keep >= 2 grid steps when B >= 2 so both v7x TensorCores
        # get work.
        rows_b = HS
        slab = HS * S
        bb = 1
        for d in _divisors(B):
            if d * slab <= target_elems and (d < B or B == 1) and d > bb:
                bb = d
        return bb, rows_b

    # Long-S path: tile the fused (head, query) row axis inside one batch
    # element. rows_b must divide H*S and be sublane-aligned for the dtype.
    rows_b = None
    for d in _divisors(HS):
        if d <= max_rows and d % sub == 0 and (rows_b is None or d > rows_b):
            rows_b = d
    if rows_b is None:
        # No aligned divisor fits the budget; fall back to the smallest
        # aligned divisor (vmem_limit below grows to cover it), else whole axis.
        aligned = [d for d in _divisors(HS) if d % sub == 0]
        rows_b = min(aligned) if aligned else HS
    return 1, rows_b


# ---------------------------------------------------------------------------
# Public wrapper
# ---------------------------------------------------------------------------
def fast_mask_softmax(scores, mask, *, batch_block=None, row_block=None,
                      in_place=False):
    """softmax(scores + mask, axis=-1).

    scores: [B, H, S, S] float; mask: [B, 1, 1, S] additive float mask.
    batch_block / row_block override the automatic tiling (row_block applies
    to the fused H*S row axis).  in_place=True aliases the output onto the
    scores buffer (matches the original in-place FastMaskSoftmax); only enable
    it when the caller donates `scores`, otherwise XLA inserts a copy.
    """
    B, H, S, S2 = scores.shape
    assert S == S2, "expected square attention score matrices"
    assert mask.shape == (B, 1, 1, S), "mask must be [B, 1, 1, S]"
    HS = H * S
    itemsize = jnp.dtype(scores.dtype).itemsize
    sub = _sublane_multiple(itemsize)

    bb, rows_b = _choose_blocks(B, HS, S, itemsize)
    if batch_block is not None:
        bb = batch_block
    if row_block is not None:
        rows_b = row_block
    assert B % bb == 0, "batch_block must divide B"
    assert HS % rows_b == 0, "row_block must divide H*S"
    assert rows_b == HS or rows_b % sub == 0, (
        f"row_block must be a multiple of {sub} for this dtype")

    # Flattened views: every softmax row is independent; the mask only depends
    # on the batch index, so (B, H*S, S) scores + (B, 1, S) mask is exact.
    scores3 = scores.reshape(B, HS, S)
    mask3 = mask.reshape(B, 1, S)

    grid = (B // bb, HS // rows_b)

    # Scoped-VMEM request: at least 48 MiB (well above every generation's
    # default), grown to cover pathological fallback tiles, capped at v7x's
    # 64 MiB physical VMEM.
    needed = bb * rows_b * S * (4 * itemsize + 12) + (2 << 20)
    vmem_limit = int(min(_VMEM_PHYS_CAP, max(_VMEM_LIMIT_FLOOR, needed)))

    n_elems = B * HS * S
    cost = pl.CostEstimate(
        flops=5 * n_elems,                       # add, sub-max, mul, 2 reduce ops / elem
        transcendentals=n_elems,                 # one exp per element
        bytes_accessed=2 * n_elems * itemsize
        + B * S * jnp.dtype(mask.dtype).itemsize,
    )

    out3 = pl.pallas_call(
        _mask_softmax_kernel,
        out_shape=jax.ShapeDtypeStruct((B, HS, S), scores.dtype),
        grid_spec=pltpu.PrefetchScalarGridSpec(
            num_scalar_prefetch=0,
            grid=grid,
            in_specs=[
                # Lane-dense (rows, S) tiles, bb batch elements per block.
                pl.BlockSpec((bb, rows_b, S), lambda b, r: (b, r, 0)),
                # Per-batch additive key mask, fetched once per batch block.
                pl.BlockSpec((bb, 1, S), lambda b, r: (b, 0, 0)),
            ],
            out_specs=pl.BlockSpec((bb, rows_b, S), lambda b, r: (b, r, 0)),
        ),
        compiler_params=pltpu.CompilerParams(
            # The softmax reduction lives entirely inside the last block dim,
            # so every grid axis is independent -> all parallel (megacore).
            dimension_semantics=("parallel", "parallel"),
            vmem_limit_bytes=vmem_limit,
        ),
        cost_estimate=cost,
        input_output_aliases={0: 0} if in_place else {},
    )(scores3, mask3)

    return out3.reshape(B, H, S, S)


# ---------------------------------------------------------------------------
# Self-test
# ---------------------------------------------------------------------------
if __name__ == "__main__":
    # Small, deterministic BERT-style example.
    batch, heads, seqlen = 2, 4, 128
    key = jax.random.PRNGKey(0)
    k1, _ = jax.random.split(key)

    scores = jax.random.normal(k1, (batch, heads, seqlen, seqlen), dtype=jnp.float32)

    # Deterministic per-example valid lengths -> additive mask (0 / -10000).
    lengths = jnp.array([seqlen, seqlen // 2], dtype=jnp.int32)
    key_pos = jnp.arange(seqlen)[None, :]                 # [1, S]
    valid = key_pos < lengths[:, None]                    # [B, S]
    add_mask = jnp.where(valid, 0.0, -10000.0).astype(jnp.float32)
    add_mask = add_mask[:, None, None, :]                 # [B, 1, 1, S]

    ref = jax.nn.softmax(scores + add_mask, axis=-1)

    # Auto-chosen tiling (short-S path: whole H*S slab, batch-folded blocks).
    out = jax.block_until_ready(fast_mask_softmax(scores, add_mask))
    assert jnp.allclose(out, ref, atol=1e-5, rtol=1e-5)

    # Force the row-tiled path that long sequences would take.
    out_rows = jax.block_until_ready(
        fast_mask_softmax(scores, add_mask, batch_block=1, row_block=128)
    )
    assert jnp.allclose(out_rows, ref, atol=1e-5, rtol=1e-5)

    # bf16 path (dtype-aware element budget + 16-row sublane alignment).
    scores_bf = scores.astype(jnp.bfloat16)
    mask_bf = add_mask.astype(jnp.bfloat16)
    ref_bf = jax.nn.softmax(
        scores_bf.astype(jnp.float32) + mask_bf.astype(jnp.float32), axis=-1)
    out_bf = jax.block_until_ready(fast_mask_softmax(scores_bf, mask_bf))
    assert jnp.allclose(out_bf.astype(jnp.float32), ref_bf, atol=1e-2, rtol=1e-2)

    # TODO(synk): backward (FastSoftmaxBprop), CUDA streams/events/timers of
    # the original extension are not represented; in-place update is only
    # available via in_place=True when the caller donates the scores buffer.
    print("KERNEL_OK")
</pallas_src>

<mosaic_0001>
module attributes {stable_mosaic.version = 11 : i64} {
  func.func @_mask_softmax_kernel(%arg0: i32, %arg1: i32, %arg2: memref<1x512x128xf32, #tpu.memory_space<vmem>>, %arg3: memref<1x1x128xf32, #tpu.memory_space<vmem>>, %arg4: memref<1x512x128xf32, #tpu.memory_space<vmem>>) attributes {dimension_semantics = [#tpu.dimension_semantics<parallel>, #tpu.dimension_semantics<parallel>], iteration_bounds = array<i64: 2, 1>, scalar_prefetch = 0 : i64, scratch_operands = 0 : i64, tpu.core_type = #tpu.core_type<tc>, window_params = [{transform_indices = @transform_0, window_bounds = array<i64: 1, 512, 128>}, {transform_indices = @transform_1, window_bounds = array<i64: 1, 1, 128>}, {transform_indices = @transform_2, window_bounds = array<i64: 1, 512, 128>}]} {
    %c0 = arith.constant 0 : index
    %c0_0 = arith.constant 0 : index
    %c0_1 = arith.constant 0 : index
    %0 = vector.load %arg2[%c0, %c0_0, %c0_1] : memref<1x512x128xf32, #tpu.memory_space<vmem>>, vector<1x512x128xf32>
    %c0_2 = arith.constant 0 : index
    %c0_3 = arith.constant 0 : index
    %c0_4 = arith.constant 0 : index
    %1 = vector.load %arg3[%c0_2, %c0_3, %c0_4] : memref<1x1x128xf32, #tpu.memory_space<vmem>>, vector<1x1x128xf32>
    %2 = vector.broadcast %1 : vector<1x1x128xf32> to vector<1x512x128xf32>
    %3 = arith.addf %0, %2 : vector<1x512x128xf32>
    %cst = arith.constant dense<0xFF800000> : vector<1x512xf32>
    %4 = vector.multi_reduction <maximumf>, %3, %cst [2] : vector<1x512x128xf32> to vector<1x512xf32>
    %5 = vector.shape_cast %4 : vector<1x512xf32> to vector<1x512x1xf32>
    %6 = vector.broadcast %5 : vector<1x512x1xf32> to vector<1x512x128xf32>
    %7 = arith.subf %3, %6 : vector<1x512x128xf32>
    %8 = math.exp %7 : vector<1x512x128xf32>
    %cst_5 = arith.constant dense<0.000000e+00> : vector<1x512xf32>
    %9 = vector.multi_reduction <add>, %8, %cst_5 [2] : vector<1x512x128xf32> to vector<1x512xf32>
    %10 = vector.shape_cast %9 : vector<1x512xf32> to vector<1x512x1xf32>
    %cst_6 = arith.constant 1.000000e+00 : f32
    %11 = vector.broadcast %cst_6 : f32 to vector<1x512x1xf32>
    %12 = arith.divf %11, %10 : vector<1x512x1xf32>
    %13 = vector.broadcast %12 : vector<1x512x1xf32> to vector<1x512x128xf32>
    %14 = arith.mulf %8, %13 : vector<1x512x128xf32>
    %c0_7 = arith.constant 0 : index
    %c0_8 = arith.constant 0 : index
    %c0_9 = arith.constant 0 : index
    %15 = vector.load %arg4[%c0_7, %c0_8, %c0_9] : memref<1x512x128xf32, #tpu.memory_space<vmem>>, vector<1x512x128xf32>
    tpu.vector_store %arg4[%c0_7, %c0_8, %c0_9], %14 {strides = array<i32>} : memref<1x512x128xf32, #tpu.memory_space<vmem>>, vector<1x512x128xf32>,
    return
  }
  func.func @transform_0(%arg0: i32, %arg1: i32) -> (i32, i32, i32) {
    %c0_i32 = arith.constant 0 : i32
    %c0_i32_0 = arith.constant 0 : i32
    return %arg0, %arg1, %c0_i32 : i32, i32, i32
  }
  func.func @transform_1(%arg0: i32, %arg1: i32) -> (i32, i32, i32) {
    %c0_i32 = arith.constant 0 : i32
    %c0_i32_0 = arith.constant 0 : i32
    %c0_i32_1 = arith.constant 0 : i32
    return %arg0, %c0_i32, %c0_i32_0 : i32, i32, i32
  }
  func.func @transform_2(%arg0: i32, %arg1: i32) -> (i32, i32, i32) {
    %c0_i32 = arith.constant 0 : i32
    %c0_i32_0 = arith.constant 0 : i32
    return %arg0, %arg1, %c0_i32 : i32, i32, i32
  }
}

</mosaic_0001>

<llo_original>
// kernel: tpu_custom_call.1
$region0: #{tpu_custom_call.1}
  #allocation0 [shape = 'u32[]', space=smem, size = 0x4, offset = 0x4, fixed_abs, tag = 'smem constant byte address 0x4 - core index']
  #allocation1 [shape = 'u32[144,128]{1,0:T(1,128)}', space=vmem, size = 0x12000, scoped, tag = 'internal scratch']
  %s0 = inlined_call_operand.hbm [shape: f32[2,512,128], index: 0, kind: input, shape index: {}]
  %s1 = inlined_call_operand.vmem [shape: f32[2,1,128], index: 1, kind: input, shape index: {}]
  %s2 = inlined_call_operand.hbm [shape: f32[2,512,128], index: 2, kind: output, shape index: {}]
  %s3 = sld [smem:[#allocation0]]
  $region45: #{tpu_custom_call.1} parent=0
    _
  %s5 = ssub.s32 1, %s3
  %s6 = scalar_select 0, %s5, %s3
  $region1: #{tpu_custom_call.1} parent=0
    #allocation2 [shape = 'u8[524288]{0}', space=vmem, size = 0x80000, scoped, tag = 'input window, operand 0']
    #allocation3 [shape = 's32[2]{0}', space=sflag, size = 0x8, scoped, tag = 'scoped memory for tpu_custom_call.1']
    #allocation4 [shape = 's32[2]{0}', space=sflag, size = 0x8, scoped, tag = 'scoped memory for tpu_custom_call.1']
    #allocation5 [shape = 'u8[524288]{0}', space=vmem, size = 0x80000, scoped, tag = 'output window, operand 0']
    %7 = vsyncpa [#allocation3], 0
    %s8 = scalar_lea.sflag [#allocation3], 1
    %9 = vsyncpa %s8, 0
    %10 = vsyncpa [#allocation4], 0
    %s11 = scalar_lea.sflag [#allocation4], 1
    %12 = vsyncpa %s11, 0
    loop: start=0, step=1, limit=4
    $region2: #{tpu_custom_call.1} parent=1 // loop_pre_header
      _
    $region3: #{tpu_custom_call.1} parent=1 // loop_header
      %s14 = sphi 0, %s18
      %p15 = scmp.ge.s32.totalorder %s14, 4
      %s21 = sphi 0, %s33
      %s22 = sphi 0, %s29
      %s23 = sphi 0, %s21
      %s24 = sphi 0, %s22
      %s25 = sphi 0, %s23
      %s26 = sphi 0, %s24
      %s38 = sphi 0, %s40
      %s41 = sphi 0, %s38
      %s42 = sphi 0, %s41
      %s58 = sphi 0, %s42
      %s64 = sphi 0, %s66
      %s67 = sphi 0, %s64
      %s68 = sphi 0, %s67
      %s84 = sphi 0, %s68
      %s92 = sphi 0, %s94
      %s95 = sphi 0, %s92
      %s96 = sphi 0, %s95
      %s112 = sphi 0, %s96
    $region4: #{tpu_custom_call.1} parent=1 // loop_header_branch
      %17 = sbr.rel (%p15) target = $region8
    $region5: #{tpu_custom_call.1} parent=1 // loop_body
      %s19 = ssub.s32 %s14, 1
      %s20 = ssub.s32 %s14, 2
      %s27 = sadd.s32 1, %s22
      %p28 = scmp.ge.s32.totalorder %s27, 1
      %s29 = scalar_select %p28, 0, %s27
      %s30 = sadd.s32 1, %s21
      %s31 = scalar_select %p28, %s30, %s21
      %p32 = scmp.ge.s32.totalorder %s31, 2
      %s33 = scalar_select %p32, 0, %s31
      %s34 = ssub.s32 %s21, %s33
      %s35 = ssub.s32 %s22, %s29
      %s36 = sor.u32 %s34, %s35
      %p37 = scmp.eq.s32.totalorder %s36, 0
      %s39 = sadd.s32 %s38, 1
      %s40 = scalar_select %p37, %s38, %s39
      %p43 = pneg %p37
      %p44 = scmp.eq.s32.totalorder %s14, 1
      %p45 = por %p43, %p44
      %p46 = scmp.ne.s32.totalorder %s38, %s41
      %p47 = scmp.eq.s32.totalorder %s14, 0
      %p48 = por %p46, %p47
      %p49 = scmp.ne.s32.totalorder %s38, %s41
      %p50 = scmp.eq.s32.totalorder %s19, 1
      %p51 = por %p49, %p50
      %p52 = scmp.ne.s32.totalorder %s41, %s42
      %p53 = scmp.eq.s32.totalorder %s19, 0
      %p54 = por %p52, %p53
      %p55 = scmp.ne.s32.totalorder %s41, %s42
      %p56 = scmp.eq.s32.totalorder %s20, 1
      %p57 = por %p55, %p56
      %p59 = scmp.ne.s32.totalorder %s42, %s58
      %p60 = scmp.eq.s32.totalorder %s20, 0
      %p61 = por %p59, %p60
      %s62 = ssub.s32 %s21, %s33
      %p63 = scmp.eq.s32.totalorder %s62, 0
      %s65 = sadd.s32 %s64, 1
      %s66 = scalar_select %p63, %s64, %s65
      %p69 = pneg %p63
      %p70 = scmp.eq.s32.totalorder %s14, 1
      %p71 = por %p69, %p70
      %p72 = scmp.ne.s32.totalorder %s64, %s67
      %p73 = scmp.eq.s32.totalorder %s14, 0
      %p74 = por %p72, %p73
      %p75 = scmp.ne.s32.totalorder %s64, %s67
      %p76 = scmp.eq.s32.totalorder %s19, 1
      %p77 = por %p75, %p76
      %p78 = scmp.ne.s32.totalorder %s67, %s68
      %p79 = scmp.eq.s32.totalorder %s19, 0
      %p80 = por %p78, %p79
      %p81 = scmp.ne.s32.totalorder %s67, %s68
      %p82 = scmp.eq.s32.totalorder %s20, 1
      %p83 = por %p81, %p82
      %p85 = scmp.ne.s32.totalorder %s68, %s84
      %p86 = scmp.eq.s32.totalorder %s20, 0
      %p87 = por %p85, %p86
      %s88 = ssub.s32 %s21, %s33
      %s89 = ssub.s32 %s22, %s29
      %s90 = sor.u32 %s88, %s89
      %p91 = scmp.eq.s32.totalorder %s90, 0
      %s93 = sadd.s32 %s92, 1
      %s94 = scalar_select %p91, %s92, %s93
      %p97 = pneg %p91
      %p98 = scmp.eq.s32.totalorder %s14, 1
      %p99 = por %p97, %p98
      %p100 = scmp.ne.s32.totalorder %s92, %s95
      %p101 = scmp.eq.s32.totalorder %s14, 0
      %p102 = por %p100, %p101
      %p103 = scmp.ne.s32.totalorder %s92, %s95
      %p104 = scmp.eq.s32.totalorder %s19, 1
      %p105 = por %p103, %p104
      %p106 = scmp.ne.s32.totalorder %s95, %s96
      %p107 = scmp.eq.s32.totalorder %s19, 0
      %p108 = por %p106, %p107
      %p109 = scmp.ne.s32.totalorder %s95, %s96
      %p110 = scmp.eq.s32.totalorder %s20, 1
      %p111 = por %p109, %p110
      %p113 = scmp.ne.s32.totalorder %s96, %s112
      %p114 = scmp.eq.s32.totalorder %s20, 0
      %p115 = por %p113, %p114
      %p116 = scmp.le.s32.totalorder 1, %s14
      %p117 = scmp.lt.s32.totalorder %s14, 3
      %p118 = pnand %p116, %p117
      %p119 = pneg %p118
      // Predicated region
      $region9: #{tpu_custom_call.1} parent=5 // pred_check
        _
      $region10: #{tpu_custom_call.1} parent=5 // pred_check_branch
        %121 = sbr.rel (%p118) target = $region12
      $region11: #{tpu_custom_call.1} parent=5 // pred_region
        %s122 = ssub.s32 %s14, 1
      $region12: #{tpu_custom_call.1} parent=5 // pred_fallthru
        _
      %p123 = scmp.lt.s32.totalorder %s14, 2
      // Predicated region
      $region13: #{tpu_custom_call.1} parent=5 // pred_check
        %p124 = pneg %p123
      $region14: #{tpu_custom_call.1} parent=5 // pred_check_branch
        %126 = sbr.rel (%p124) target = $region16
      $region15: #{tpu_custom_call.1} parent=5 // pred_region
        // Predicated region
        $region17: #{tpu_custom_call.1} parent=15 // pred_check
          %p127 = pneg %p48
        $region18: #{tpu_custom_call.1} parent=15 // pred_check_branch
          %129 = sbr.rel (%p127) target = $region20
        $region19: #{tpu_custom_call.1} parent=15 // pred_region
          %s130 = sand.u32 %s38, 1
          %s131 = scalar_lea.sflag [#allocation3], %s130
          %s132 = sand.u32 %s38, 1
          %s133 = smul.addr %s132, 512
          %s134 = scalar_lea.vmem [#allocation2], %s133
          %s135 = smul.u32 64, %s22
          %s137 = ssub.s32 8192, 8192
          %138 = vsyncadd %s131, %s137
          %s139 = smul.addr %s21, 64
          %s140 = sadd.s32 %s135, %s139
          %s141 = smul.addr %s140, 128
          %s142 = scalar_lea.hbm %s0, %s141
          %s143 = sshll.u32 %s134, 4
          %s144 = int_to_ptr.vmem [resolvable:$true] %s143
          %149 = dma.hbm_to_vmem [thread:$0]  %s142, 8192, %s144, %s131, 128, 128, 8
        $region20: #{tpu_custom_call.1} parent=15 // pred_fallthru
          _
        // Predicated region
        $region21: #{tpu_custom_call.1} parent=15 // pred_check
          %p150 = pneg %p74
        $region22: #{tpu_custom_call.1} parent=15 // pred_check_branch
          %152 = sbr.rel (%p150) target = $region24
        $region23: #{tpu_custom_call.1} parent=15 // pred_region
          %p153 = scmp.lt.s32.totalorder %s21, 1
          %s154 = scalar_select %p153, %s21, 1
          %s155 = scalar_lea.vmem %s1, %s154
        $region24: #{tpu_custom_call.1} parent=15 // pred_fallthru
          _
      $region16: #{tpu_custom_call.1} parent=5 // pred_fallthru
        _
      %p156 = scmp.le.s32.totalorder 1, %s14
      %p157 = scmp.lt.s32.totalorder %s14, 3
      %p158 = pnand %p156, %p157
      %p159 = pneg %p158
      // Predicated region
      $region25: #{tpu_custom_call.1} parent=5 // pred_check
        _
      $region26: #{tpu_custom_call.1} parent=5 // pred_check_branch
        %161 = sbr.rel (%p158) target = $region28
      $region27: #{tpu_custom_call.1} parent=5 // pred_region
        %s162 = ssub.s32 %s14, 1
        %s163 = sand.u32 %s41, 1
        %s164 = scalar_lea.sflag [#allocation3], %s163
        %s165 = sand.u32 %s41, 1
        %s166 = smul.addr %s165, 512
        %s167 = scalar_lea.vmem [#allocation2], %s166
        // Predicated region
        $region29: #{tpu_custom_call.1} parent=27 // pred_check
          %p168 = pneg %p54
        $region30: #{tpu_custom_call.1} parent=27 // pred_check_branch
          %170 = sbr.rel (%p168) target = $region32
        $region31: #{tpu_custom_call.1} parent=27 // pred_region
          %171 = dma.done %s164, 8192
        $region32: #{tpu_custom_call.1} parent=27 // pred_fallthru
          _
        %s172 = sand.u32 %s41, 1
        %s173 = scalar_lea.sflag [#allocation3], %s172
        %s174 = sand.u32 %s41, 1
        %s175 = smul.addr %s174, 512
        %s176 = scalar_lea.vmem [#allocation2], %s175
        %p177 = pneg %p54
        %p178 = pneg %p51
        %p179 = scmp.lt.s32.totalorder %s23, 1
        %s180 = scalar_select %p179, %s23, 1
        %s181 = scalar_lea.vmem %s1, %s180
        %p182 = pneg %p80
        %p183 = pneg %p77
        %p184 = pneg %p108
        %p185 = pneg %p105
        %s186 = sand.u32 %s95, 1
        %s187 = scalar_lea.sflag [#allocation4], %s186
        %s188 = sand.u32 %s95, 1
        %s189 = smul.addr %s188, 512
        %s190 = scalar_lea.vmem [#allocation5], %s189
        %s191 = smul.u32 64, %s24
        %p192 = scmp.lt.s32.totalorder %s23, 1
        %s193 = scalar_select %p192, %s23, 1
        %s194 = scalar_lea.vmem %s1, %s193
        %s195 = smul.u32 64, %s24
        %v196 = vld [vmem:[%s167] sm:$0xff]
        %v197 = vld [vmem:[%s167 + $0x8] sm:$0xff]
        %v198 = vld [vmem:[%s167 + $0x10] sm:$0xff]
        %v199 = vld [vmem:[%s167 + $0x18] sm:$0xff]
        %v200 = vld [vmem:[%s167 + $0x20] sm:$0xff]
        %v201 = vld [vmem:[%s167 + $0x28] sm:$0xff]
        %v202 = vld [vmem:[%s167 + $0x30] sm:$0xff]
        %v203 = vld [vmem:[%s167 + $0x38] sm:$0xff]
        %v204 = vld [vmem:[%s167 + $0x40] sm:$0xff]
        %v205 = vld [vmem:[%s167 + $0x48] sm:$0xff]
        %v206 = vld [vmem:[%s167 + $0x50] sm:$0xff]
        %v207 = vld [vmem:[%s167 + $0x58] sm:$0xff]
        %v208 = vld [vmem:[%s167 + $0x60] sm:$0xff]
        %v209 = vld [vmem:[%s167 + $0x68] sm:$0xff]
        %v210 = vld [vmem:[%s167 + $0x70] sm:$0xff]
        %v211 = vld [vmem:[%s167 + $0x78] sm:$0xff]
        %v212 = vld [vmem:[%s167 + $0x80] sm:$0xff]
        %v213 = vld [vmem:[%s167 + $0x88] sm:$0xff]
        %v214 = vld [vmem:[%s167 + $0x90] sm:$0xff]
        %v215 = vld [vmem:[%s167 + $0x98] sm:$0xff]
        %v216 = vld [vmem:[%s167 + $0xa0] sm:$0xff]
        %v217 = vld [vmem:[%s167 + $0xa8] sm:$0xff]
        %v218 = vld [vmem:[%s167 + $0xb0] sm:$0xff]
        %v219 = vld [vmem:[%s167 + $0xb8] sm:$0xff]
        %v220 = vld [vmem:[%s167 + $0xc0] sm:$0xff]
        %v221 = vld [vmem:[%s167 + $0xc8] sm:$0xff]
        %v222 = vld [vmem:[%s167 + $0xd0] sm:$0xff]
        %v223 = vld [vmem:[%s167 + $0xd8] sm:$0xff]
        %v224 = vld [vmem:[%s167 + $0xe0] sm:$0xff]
        %v225 = vld [vmem:[%s167 + $0xe8] sm:$0xff]
        %v226 = vld [vmem:[%s167 + $0xf0] sm:$0xff]
        %v227 = vld [vmem:[%s167 + $0xf8] sm:$0xff]
        %v228 = vld [vmem:[%s167 + $0x100] sm:$0xff]
        %v229 = vld [vmem:[%s167 + $0x108] sm:$0xff]
        %v230 = vld [vmem:[%s167 + $0x110] sm:$0xff]
        %v231 = vld [vmem:[%s167 + $0x118] sm:$0xff]
        %v232 = vld [vmem:[%s167 + $0x120] sm:$0xff]
        %v233 = vld [vmem:[%s167 + $0x128] sm:$0xff]
        %v234 = vld [vmem:[%s167 + $0x130] sm:$0xff]
        %v235 = vld [vmem:[%s167 + $0x138] sm:$0xff]
        %v236 = vld [vmem:[%s167 + $0x140] sm:$0xff]
        %v237 = vld [vmem:[%s167 + $0x148] sm:$0xff]
        %v238 = vld [vmem:[%s167 + $0x150] sm:$0xff]
        %v239 = vld [vmem:[%s167 + $0x158] sm:$0xff]
        %v240 = vld [vmem:[%s167 + $0x160] sm:$0xff]
        %v241 = vld [vmem:[%s167 + $0x168] sm:$0xff]
        %v242 = vld [vmem:[%s167 + $0x170] sm:$0xff]
        %v243 = vld [vmem:[%s167 + $0x178] sm:$0xff]
        %v244 = vld [vmem:[%s167 + $0x180] sm:$0xff]
        %v245 = vld [vmem:[%s167 + $0x188] sm:$0xff]
        %v246 = vld [vmem:[%s167 + $0x190] sm:$0xff]
        %v247 = vld [vmem:[%s167 + $0x198] sm:$0xff]
        %v248 = vld [vmem:[%s167 + $0x1a0] sm:$0xff]
        %v249 = vld [vmem:[%s167 + $0x1a8] sm:$0xff]
        %v250 = vld [vmem:[%s167 + $0x1b0] sm:$0xff]
        %v251 = vld [vmem:[%s167 + $0x1b8] sm:$0xff]
        %v252 = vld [vmem:[%s167 + $0x1c0] sm:$0xff]
        %v253 = vld [vmem:[%s167 + $0x1c8] sm:$0xff]
        %v254 = vld [vmem:[%s167 + $0x1d0] sm:$0xff]
        %v255 = vld [vmem:[%s167 + $0x1d8] sm:$0xff]
        %v256 = vld [vmem:[%s167 + $0x1e0] sm:$0xff]
        %v257 = vld [vmem:[%s167 + $0x1e8] sm:$0xff]
        %v258 = vld [vmem:[%s167 + $0x1f0] sm:$0xff]
        %v259 = vld [vmem:[%s167 + $0x1f8] sm:$0xff]
        %v260 = vld [vmem:[%s194] sm:$0x1]
        %v262 = vlaneseq
        %v263 = vshrl.u32 %v262, 7
        %v264 = vsub.s32 0, %v263
        %v265 = vrot.slane %v260, %v264
        %v267 = vadd.f32 %v196, %v265
        %v268 = vadd.f32 %v197, %v265
        %v269 = vadd.f32 %v198, %v265
        %v270 = vadd.f32 %v199, %v265
        %v271 = vadd.f32 %v200, %v265
        %v272 = vadd.f32 %v201, %v265
        %v273 = vadd.f32 %v202, %v265
        %v274 = vadd.f32 %v203, %v265
        %v275 = vadd.f32 %v204, %v265
        %v276 = vadd.f32 %v205, %v265
        %v277 = vadd.f32 %v206, %v265
        %v278 = vadd.f32 %v207, %v265
        %v279 = vadd.f32 %v208, %v265
        %v280 = vadd.f32 %v209, %v265
        %v281 = vadd.f32 %v210, %v265
        %v282 = vadd.f32 %v211, %v265
        %v283 = vadd.f32 %v212, %v265
        %v284 = vadd.f32 %v213, %v265
        %v285 = vadd.f32 %v214, %v265
        %v286 = vadd.f32 %v215, %v265
        %v287 = vadd.f32 %v216, %v265
        %v288 = vadd.f32 %v217, %v265
        %v289 = vadd.f32 %v218, %v265
        %v290 = vadd.f32 %v219, %v265
        %v291 = vadd.f32 %v220, %v265
        %v292 = vadd.f32 %v221, %v265
        %v293 = vadd.f32 %v222, %v265
        %v294 = vadd.f32 %v223, %v265
        %v295 = vadd.f32 %v224, %v265
        %v296 = vadd.f32 %v225, %v265
        %v297 = vadd.f32 %v226, %v265
        %v298 = vadd.f32 %v227, %v265
        %v299 = vadd.f32 %v228, %v265
        %v300 = vadd.f32 %v229, %v265
        %v301 = vadd.f32 %v230, %v265
        %v302 = vadd.f32 %v231, %v265
        %v303 = vadd.f32 %v232, %v265
        %v304 = vadd.f32 %v233, %v265
        %v305 = vadd.f32 %v234, %v265
        %v306 = vadd.f32 %v235, %v265
        %v307 = vadd.f32 %v236, %v265
        %v308 = vadd.f32 %v237, %v265
        %v309 = vadd.f32 %v238, %v265
        %v310 = vadd.f32 %v239, %v265
        %v311 = vadd.f32 %v240, %v265
        %v312 = vadd.f32 %v241, %v265
        %v313 = vadd.f32 %v242, %v265
        %v314 = vadd.f32 %v243, %v265
        %v315 = vadd.f32 %v244, %v265
        %v316 = vadd.f32 %v245, %v265
        %v317 = vadd.f32 %v246, %v265
        %v318 = vadd.f32 %v247, %v265
        %v319 = vadd.f32 %v248, %v265
        %v320 = vadd.f32 %v249, %v265
        %v321 = vadd.f32 %v250, %v265
        %v322 = vadd.f32 %v251, %v265
        %v323 = vadd.f32 %v252, %v265
        %v324 = vadd.f32 %v253, %v265
        %v325 = vadd.f32 %v254, %v265
        %v326 = vadd.f32 %v255, %v265
        %v327 = vadd.f32 %v256, %v265
        %v328 = vadd.f32 %v257, %v265
        %v329 = vadd.f32 %v258, %v265
        %v330 = vadd.f32 %v259, %v265
        %331 = vmax.xlane.f32.xlu0 %v267
        %v332 = vpop.xlane.xlu0 %331
        %333 = vmax.xlane.f32.xlu0 %v268
        %v334 = vpop.xlane.xlu0 %333
        %335 = vmax.xlane.f32.xlu0 %v269
        %v336 = vpop.xlane.xlu0 %335
        %337 = vmax.xlane.f32.xlu0 %v270
        %v338 = vpop.xlane.xlu0 %337
        %339 = vmax.xlane.f32.xlu0 %v271
        %v340 = vpop.xlane.xlu0 %339
        %341 = vmax.xlane.f32.xlu0 %v272
        %v342 = vpop.xlane.xlu0 %341
        %343 = vmax.xlane.f32.xlu0 %v273
        %v344 = vpop.xlane.xlu0 %343
        %345 = vmax.xlane.f32.xlu0 %v274
        %v346 = vpop.xlane.xlu0 %345
        %347 = vmax.xlane.f32.xlu0 %v275
        %v348 = vpop.xlane.xlu0 %347
        %349 = vmax.xlane.f32.xlu0 %v276
        %v350 = vpop.xlane.xlu0 %349
        %351 = vmax.xlane.f32.xlu0 %v277
        %v352 = vpop.xlane.xlu0 %351
        %353 = vmax.xlane.f32.xlu0 %v278
        %v354 = vpop.xlane.xlu0 %353
        %355 = vmax.xlane.f32.xlu0 %v279
        %v356 = vpop.xlane.xlu0 %355
        %357 = vmax.xlane.f32.xlu0 %v280
        %v358 = vpop.xlane.xlu0 %357
        %359 = vmax.xlane.f32.xlu0 %v281
        %v360 = vpop.xlane.xlu0 %359
        %361 = vmax.xlane.f32.xlu0 %v282
        %v362 = vpop.xlane.xlu0 %361
        %363 = vmax.xlane.f32.xlu0 %v283
        %v364 = vpop.xlane.xlu0 %363
        %365 = vmax.xlane.f32.xlu0 %v284
        %v366 = vpop.xlane.xlu0 %365
        %367 = vmax.xlane.f32.xlu0 %v285
        %v368 = vpop.xlane.xlu0 %367
        %369 = vmax.xlane.f32.xlu0 %v286
        %v370 = vpop.xlane.xlu0 %369
        %371 = vmax.xlane.f32.xlu0 %v287
        %v372 = vpop.xlane.xlu0 %371
        %373 = vmax.xlane.f32.xlu0 %v288
        %v374 = vpop.xlane.xlu0 %373
        %375 = vmax.xlane.f32.xlu0 %v289
        %v376 = vpop.xlane.xlu0 %375
        %377 = vmax.xlane.f32.xlu0 %v290
        %v378 = vpop.xlane.xlu0 %377
        %379 = vmax.xlane.f32.xlu0 %v291
        %v380 = vpop.xlane.xlu0 %379
        %381 = vmax.xlane.f32.xlu0 %v292
        %v382 = vpop.xlane.xlu0 %381
        %383 = vmax.xlane.f32.xlu0 %v293
        %v384 = vpop.xlane.xlu0 %383
        %385 = vmax.xlane.f32.xlu0 %v294
        %v386 = vpop.xlane.xlu0 %385
        %387 = vmax.xlane.f32.xlu0 %v295
        %v388 = vpop.xlane.xlu0 %387
        %389 = vmax.xlane.f32.xlu0 %v296
        %v390 = vpop.xlane.xlu0 %389
        %391 = vmax.xlane.f32.xlu0 %v297
        %v392 = vpop.xlane.xlu0 %391
        %393 = vmax.xlane.f32.xlu0 %v298
        %v394 = vpop.xlane.xlu0 %393
        %395 = vmax.xlane.f32.xlu0 %v299
        %v396 = vpop.xlane.xlu0 %395
        %397 = vmax.xlane.f32.xlu0 %v300
        %v398 = vpop.xlane.xlu0 %397
        %399 = vmax.xlane.f32.xlu0 %v301
        %v400 = vpop.xlane.xlu0 %399
        %401 = vmax.xlane.f32.xlu0 %v302
        %v402 = vpop.xlane.xlu0 %401
        %403 = vmax.xlane.f32.xlu0 %v303
        %v404 = vpop.xlane.xlu0 %403
        %405 = vmax.xlane.f32.xlu0 %v304
        %v406 = vpop.xlane.xlu0 %405
        %407 = vmax.xlane.f32.xlu0 %v305
        %v408 = vpop.xlane.xlu0 %407
        %409 = vmax.xlane.f32.xlu0 %v306
        %v410 = vpop.xlane.xlu0 %409
        %411 = vmax.xlane.f32.xlu0 %v307
        %v412 = vpop.xlane.xlu0 %411
        %413 = vmax.xlane.f32.xlu0 %v308
        %v414 = vpop.xlane.xlu0 %413
        %415 = vmax.xlane.f32.xlu0 %v309
        %v416 = vpop.xlane.xlu0 %415
        %417 = vmax.xlane.f32.xlu0 %v310
        %v418 = vpop.xlane.xlu0 %417
        %419 = vmax.xlane.f32.xlu0 %v311
        %v420 = vpop.xlane.xlu0 %419
        %421 = vmax.xlane.f32.xlu0 %v312
        %v422 = vpop.xlane.xlu0 %421
        %423 = vmax.xlane.f32.xlu0 %v313
        %v424 = vpop.xlane.xlu0 %423
        %425 = vmax.xlane.f32.xlu0 %v314
        %v426 = vpop.xlane.xlu0 %425
        %427 = vmax.xlane.f32.xlu0 %v315
        %v428 = vpop.xlane.xlu0 %427
        %429 = vmax.xlane.f32.xlu0 %v316
        %v430 = vpop.xlane.xlu0 %429
        %431 = vmax.xlane.f32.xlu0 %v317
        %v432 = vpop.xlane.xlu0 %431
        %433 = vmax.xlane.f32.xlu0 %v318
        %v434 = vpop.xlane.xlu0 %433
        %435 = vmax.xlane.f32.xlu0 %v319
        %v436 = vpop.xlane.xlu0 %435
        %437 = vmax.xlane.f32.xlu0 %v320
        %v438 = vpop.xlane.xlu0 %437
        %439 = vmax.xlane.f32.xlu0 %v321
        %v440 = vpop.xlane.xlu0 %439
        %441 = vmax.xlane.f32.xlu0 %v322
        %v442 = vpop.xlane.xlu0 %441
        %443 = vmax.xlane.f32.xlu0 %v323
        %v444 = vpop.xlane.xlu0 %443
        %445 = vmax.xlane.f32.xlu0 %v324
        %v446 = vpop.xlane.xlu0 %445
        %447 = vmax.xlane.f32.xlu0 %v325
        %v448 = vpop.xlane.xlu0 %447
        %449 = vmax.xlane.f32.xlu0 %v326
        %v450 = vpop.xlane.xlu0 %449
        %451 = vmax.xlane.f32.xlu0 %v327
        %v452 = vpop.xlane.xlu0 %451
        %453 = vmax.xlane.f32.xlu0 %v328
        %v454 = vpop.xlane.xlu0 %453
        %455 = vmax.xlane.f32.xlu0 %v329
        %v456 = vpop.xlane.xlu0 %455
        %457 = vmax.xlane.f32.xlu0 %v330
        %v458 = vpop.xlane.xlu0 %457
        %v459 = vsub.f32 %v267, %v332
        %v460 = vsub.f32 %v268, %v334
        %v461 = vsub.f32 %v269, %v336
        %v462 = vsub.f32 %v270, %v338
        %v463 = vsub.f32 %v271, %v340
        %v464 = vsub.f32 %v272, %v342
        %v465 = vsub.f32 %v273, %v344
        %v466 = vsub.f32 %v274, %v346
        %v467 = vsub.f32 %v275, %v348
        %v468 = vsub.f32 %v276, %v350
        %v469 = vsub.f32 %v277, %v352
        %v470 = vsub.f32 %v278, %v354
        %v471 = vsub.f32 %v279, %v356
        %v472 = vsub.f32 %v280, %v358
        %v473 = vsub.f32 %v281, %v360
        %v474 = vsub.f32 %v282, %v362
        %v475 = vsub.f32 %v283, %v364
        %v476 = vsub.f32 %v284, %v366
        %v477 = vsub.f32 %v285, %v368
        %v478 = vsub.f32 %v286, %v370
        %v479 = vsub.f32 %v287, %v372
        %v480 = vsub.f32 %v288, %v374
        %v481 = vsub.f32 %v289, %v376
        %v482 = vsub.f32 %v290, %v378
        %v483 = vsub.f32 %v291, %v380
        %v484 = vsub.f32 %v292, %v382
        %v485 = vsub.f32 %v293, %v384
        %v486 = vsub.f32 %v294, %v386
        %v487 = vsub.f32 %v295, %v388
        %v488 = vsub.f32 %v296, %v390
        %v489 = vsub.f32 %v297, %v392
        %v490 = vsub.f32 %v298, %v394
        %v491 = vsub.f32 %v299, %v396
        %v492 = vsub.f32 %v300, %v398
        %v493 = vsub.f32 %v301, %v400
        %v494 = vsub.f32 %v302, %v402
        %v495 = vsub.f32 %v303, %v404
        %v496 = vsub.f32 %v304, %v406
        %v497 = vsub.f32 %v305, %v408
        %v498 = vsub.f32 %v306, %v410
        %v499 = vsub.f32 %v307, %v412
        %v500 = vsub.f32 %v308, %v414
        %v501 = vsub.f32 %v309, %v416
        %v502 = vsub.f32 %v310, %v418
        %v503 = vsub.f32 %v311, %v420
        %v504 = vsub.f32 %v312, %v422
        %v505 = vsub.f32 %v313, %v424
        %v506 = vsub.f32 %v314, %v426
        %v507 = vsub.f32 %v315, %v428
        %v508 = vsub.f32 %v316, %v430
        %v509 = vsub.f32 %v317, %v432
        %v510 = vsub.f32 %v318, %v434
        %v511 = vsub.f32 %v319, %v436
        %v512 = vsub.f32 %v320, %v438
        %v513 = vsub.f32 %v321, %v440
        %v514 = vsub.f32 %v322, %v442
        %v515 = vsub.f32 %v323, %v444
        %v516 = vsub.f32 %v324, %v446
        %v517 = vsub.f32 %v325, %v448
        %v518 = vsub.f32 %v326, %v450
        %v519 = vsub.f32 %v327, %v452
        %v520 = vsub.f32 %v328, %v454
        %v521 = vsub.f32 %v329, %v456
        %v522 = vsub.f32 %v330, %v458
        %v523 = vmul.f32 %v459, 1.442695
        %v524 = vpow.pop %v523
        %v525 = vmul.f32 %v460, 1.442695
        %v526 = vpow.pop %v525
        %v527 = vmul.f32 %v461, 1.442695
        %v528 = vpow.pop %v527
        %v529 = vmul.f32 %v462, 1.442695
        %v530 = vpow.pop %v529
        %v531 = vmul.f32 %v463, 1.442695
        %v532 = vpow.pop %v531
        %v533 = vmul.f32 %v464, 1.442695
        %v534 = vpow.pop %v533
        %v535 = vmul.f32 %v465, 1.442695
        %v536 = vpow.pop %v535
        %v537 = vmul.f32 %v466, 1.442695
        %v538 = vpow.pop %v537
        %v539 = vmul.f32 %v467, 1.442695
        %v540 = vpow.pop %v539
        %v541 = vmul.f32 %v468, 1.442695
        %v542 = vpow.pop %v541
        %v543 = vmul.f32 %v469, 1.442695
        %v544 = vpow.pop %v543
        %v545 = vmul.f32 %v470, 1.442695
        %v546 = vpow.pop %v545
        %v547 = vmul.f32 %v471, 1.442695
        %v548 = vpow.pop %v547
        %v549 = vmul.f32 %v472, 1.442695
        %v550 = vpow.pop %v549
        %v551 = vmul.f32 %v473, 1.442695
        %v552 = vpow.pop %v551
        %v553 = vmul.f32 %v474, 1.442695
        %v554 = vpow.pop %v553
        %v555 = vmul.f32 %v475, 1.442695
        %v556 = vpow.pop %v555
        %v557 = vmul.f32 %v476, 1.442695
        %v558 = vpow.pop %v557
        %v559 = vmul.f32 %v477, 1.442695
        %v560 = vpow.pop %v559
        %v561 = vmul.f32 %v478, 1.442695
        %v562 = vpow.pop %v561
        %v563 = vmul.f32 %v479, 1.442695
        %v564 = vpow.pop %v563
        %v565 = vmul.f32 %v480, 1.442695
        %v566 = vpow.pop %v565
        %v567 = vmul.f32 %v481, 1.442695
        %v568 = vpow.pop %v567
        %v569 = vmul.f32 %v482, 1.442695
        %v570 = vpow.pop %v569
        %v571 = vmul.f32 %v483, 1.442695
        %v572 = vpow.pop %v571
        %v573 = vmul.f32 %v484, 1.442695
        %v574 = vpow.pop %v573
        %v575 = vmul.f32 %v485, 1.442695
        %v576 = vpow.pop %v575
        %v577 = vmul.f32 %v486, 1.442695
        %v578 = vpow.pop %v577
        %v579 = vmul.f32 %v487, 1.442695
        %v580 = vpow.pop %v579
        %v581 = vmul.f32 %v488, 1.442695
        %v582 = vpow.pop %v581
        %v583 = vmul.f32 %v489, 1.442695
        %v584 = vpow.pop %v583
        %v585 = vmul.f32 %v490, 1.442695
        %v586 = vpow.pop %v585
        %v587 = vmul.f32 %v491, 1.442695
        %v588 = vpow.pop %v587
        %v589 = vmul.f32 %v492, 1.442695
        %v590 = vpow.pop %v589
        %v591 = vmul.f32 %v493, 1.442695
        %v592 = vpow.pop %v591
        %v593 = vmul.f32 %v494, 1.442695
        %v594 = vpow.pop %v593
        %v595 = vmul.f32 %v495, 1.442695
        %v596 = vpow.pop %v595
        %v597 = vmul.f32 %v496, 1.442695
        %v598 = vpow.pop %v597
        %v599 = vmul.f32 %v497, 1.442695
        %v600 = vpow.pop %v599
        %v601 = vmul.f32 %v498, 1.442695
        %v602 = vpow.pop %v601
        %v603 = vmul.f32 %v499, 1.442695
        %v604 = vpow.pop %v603
        %v605 = vmul.f32 %v500, 1.442695
        %v606 = vpow.pop %v605
        %v607 = vmul.f32 %v501, 1.442695
        %v608 = vpow.pop %v607
        %v609 = vmul.f32 %v502, 1.442695
        %v610 = vpow.pop %v609
        %v611 = vmul.f32 %v503, 1.442695
        %v612 = vpow.pop %v611
        %v613 = vmul.f32 %v504, 1.442695
        %v614 = vpow.pop %v613
        %v615 = vmul.f32 %v505, 1.442695
        %v616 = vpow.pop %v615
        %v617 = vmul.f32 %v506, 1.442695
        %v618 = vpow.pop %v617
        %v619 = vmul.f32 %v507, 1.442695
        %v620 = vpow.pop %v619
        %v621 = vmul.f32 %v508, 1.442695
        %v622 = vpow.pop %v621
        %v623 = vmul.f32 %v509, 1.442695
        %v624 = vpow.pop %v623
        %v625 = vmul.f32 %v510, 1.442695
        %v626 = vpow.pop %v625
        %v627 = vmul.f32 %v511, 1.442695
        %v628 = vpow.pop %v627
        %v629 = vmul.f32 %v512, 1.442695
        %v630 = vpow.pop %v629
        %v631 = vmul.f32 %v513, 1.442695
        %v632 = vpow.pop %v631
        %v633 = vmul.f32 %v514, 1.442695
        %v634 = vpow.pop %v633
        %v635 = vmul.f32 %v515, 1.442695
        %v636 = vpow.pop %v635
        %v637 = vmul.f32 %v516, 1.442695
        %v638 = vpow.pop %v637
        %v639 = vmul.f32 %v517, 1.442695
        %v640 = vpow.pop %v639
        %v641 = vmul.f32 %v518, 1.442695
        %v642 = vpow.pop %v641
        %v643 = vmul.f32 %v519, 1.442695
        %v644 = vpow.pop %v643
        %v645 = vmul.f32 %v520, 1.442695
        %v646 = vpow.pop %v645
        %v647 = vmul.f32 %v521, 1.442695
        %v648 = vpow.pop %v647
        %v649 = vmul.f32 %v522, 1.442695
        %v650 = vpow.pop %v649
        %651 = vadd.xlane.f32.xlu0 %v524
        %v652 = vpop.xlane.xlu0 %651
        %653 = vadd.xlane.f32.xlu0 %v526
        %v654 = vpop.xlane.xlu0 %653
        %655 = vadd.xlane.f32.xlu0 %v528
        %v656 = vpop.xlane.xlu0 %655
        %657 = vadd.xlane.f32.xlu0 %v530
        %v658 = vpop.xlane.xlu0 %657
        %659 = vadd.xlane.f32.xlu0 %v532
        %v660 = vpop.xlane.xlu0 %659
        %661 = vadd.xlane.f32.xlu0 %v534
        %v662 = vpop.xlane.xlu0 %661
        %663 = vadd.xlane.f32.xlu0 %v536
        %v664 = vpop.xlane.xlu0 %663
        %665 = vadd.xlane.f32.xlu0 %v538
        %v666 = vpop.xlane.xlu0 %665
        %667 = vadd.xlane.f32.xlu0 %v540
        %v668 = vpop.xlane.xlu0 %667
        %669 = vadd.xlane.f32.xlu0 %v542
        %v670 = vpop.xlane.xlu0 %669
        %671 = vadd.xlane.f32.xlu0 %v544
        %v672 = vpop.xlane.xlu0 %671
        %673 = vadd.xlane.f32.xlu0 %v546
        %v674 = vpop.xlane.xlu0 %673
        %675 = vadd.xlane.f32.xlu0 %v548
        %v676 = vpop.xlane.xlu0 %675
        %677 = vadd.xlane.f32.xlu0 %v550
        %v678 = vpop.xlane.xlu0 %677
        %679 = vadd.xlane.f32.xlu0 %v552
        %v680 = vpop.xlane.xlu0 %679
        %681 = vadd.xlane.f32.xlu0 %v554
        %v682 = vpop.xlane.xlu0 %681
        %683 = vadd.xlane.f32.xlu0 %v556
        %v684 = vpop.xlane.xlu0 %683
        %685 = vadd.xlane.f32.xlu0 %v558
        %v686 = vpop.xlane.xlu0 %685
        %687 = vadd.xlane.f32.xlu0 %v560
        %v688 = vpop.xlane.xlu0 %687
        %689 = vadd.xlane.f32.xlu0 %v562
        %v690 = vpop.xlane.xlu0 %689
        %691 = vadd.xlane.f32.xlu0 %v564
        %v692 = vpop.xlane.xlu0 %691
        %693 = vadd.xlane.f32.xlu0 %v566
        %v694 = vpop.xlane.xlu0 %693
        %695 = vadd.xlane.f32.xlu0 %v568
        %v696 = vpop.xlane.xlu0 %695
        %697 = vadd.xlane.f32.xlu0 %v570
        %v698 = vpop.xlane.xlu0 %697
        %699 = vadd.xlane.f32.xlu0 %v572
        %v700 = vpop.xlane.xlu0 %699
        %701 = vadd.xlane.f32.xlu0 %v574
        %v702 = vpop.xlane.xlu0 %701
        %703 = vadd.xlane.f32.xlu0 %v576
        %v704 = vpop.xlane.xlu0 %703
        %705 = vadd.xlane.f32.xlu0 %v578
        %v706 = vpop.xlane.xlu0 %705
        %707 = vadd.xlane.f32.xlu0 %v580
        %v708 = vpop.xlane.xlu0 %707
        %709 = vadd.xlane.f32.xlu0 %v582
        %v710 = vpop.xlane.xlu0 %709
        %711 = vadd.xlane.f32.xlu0 %v584
        %v712 = vpop.xlane.xlu0 %711
        %713 = vadd.xlane.f32.xlu0 %v586
        %v714 = vpop.xlane.xlu0 %713
        %715 = vadd.xlane.f32.xlu0 %v588
        %v716 = vpop.xlane.xlu0 %715
        %717 = vadd.xlane.f32.xlu0 %v590
        %v718 = vpop.xlane.xlu0 %717
        %719 = vadd.xlane.f32.xlu0 %v592
        %v720 = vpop.xlane.xlu0 %719
        %721 = vadd.xlane.f32.xlu0 %v594
        %v722 = vpop.xlane.xlu0 %721
        %723 = vadd.xlane.f32.xlu0 %v596
        %v724 = vpop.xlane.xlu0 %723
        %725 = vadd.xlane.f32.xlu0 %v598
        %v726 = vpop.xlane.xlu0 %725
        %727 = vadd.xlane.f32.xlu0 %v600
        %v728 = vpop.xlane.xlu0 %727
        %729 = vadd.xlane.f32.xlu0 %v602
        %v730 = vpop.xlane.xlu0 %729
        %731 = vadd.xlane.f32.xlu0 %v604
        %v732 = vpop.xlane.xlu0 %731
        %733 = vadd.xlane.f32.xlu0 %v606
        %v734 = vpop.xlane.xlu0 %733
        %735 = vadd.xlane.f32.xlu0 %v608
        %v736 = vpop.xlane.xlu0 %735
        %737 = vadd.xlane.f32.xlu0 %v610
        %v738 = vpop.xlane.xlu0 %737
        %739 = vadd.xlane.f32.xlu0 %v612
        %v740 = vpop.xlane.xlu0 %739
        %741 = vadd.xlane.f32.xlu0 %v614
        %v742 = vpop.xlane.xlu0 %741
        %743 = vadd.xlane.f32.xlu0 %v616
        %v744 = vpop.xlane.xlu0 %743
        %745 = vadd.xlane.f32.xlu0 %v618
        %v746 = vpop.xlane.xlu0 %745
        %747 = vadd.xlane.f32.xlu0 %v620
        %v748 = vpop.xlane.xlu0 %747
        %749 = vadd.xlane.f32.xlu0 %v622
        %v750 = vpop.xlane.xlu0 %749
        %751 = vadd.xlane.f32.xlu0 %v624
        %v752 = vpop.xlane.xlu0 %751
        %753 = vadd.xlane.f32.xlu0 %v626
        %v754 = vpop.xlane.xlu0 %753
        %755 = vadd.xlane.f32.xlu0 %v628
        %v756 = vpop.xlane.xlu0 %755
        %757 = vadd.xlane.f32.xlu0 %v630
        %v758 = vpop.xlane.xlu0 %757
        %759 = vadd.xlane.f32.xlu0 %v632
        %v760 = vpop.xlane.xlu0 %759
        %761 = vadd.xlane.f32.xlu0 %v634
        %v762 = vpop.xlane.xlu0 %761
        %763 = vadd.xlane.f32.xlu0 %v636
        %v764 = vpop.xlane.xlu0 %763
        %765 = vadd.xlane.f32.xlu0 %v638
        %v766 = vpop.xlane.xlu0 %765
        %767 = vadd.xlane.f32.xlu0 %v640
        %v768 = vpop.xlane.xlu0 %767
        %769 = vadd.xlane.f32.xlu0 %v642
        %v770 = vpop.xlane.xlu0 %769
        %771 = vadd.xlane.f32.xlu0 %v644
        %v772 = vpop.xlane.xlu0 %771
        %773 = vadd.xlane.f32.xlu0 %v646
        %v774 = vpop.xlane.xlu0 %773
        %775 = vadd.xlane.f32.xlu0 %v648
        %v776 = vpop.xlane.xlu0 %775
        %777 = vadd.xlane.f32.xlu0 %v650
        %v778 = vpop.xlane.xlu0 %777
        %v779 = vrcp.pop %v652
        %v780 = vmul.f32 1.0, %v779
        %v781 = vrcp.pop %v654
        %v782 = vmul.f32 1.0, %v781
        %v783 = vrcp.pop %v656
        %v784 = vmul.f32 1.0, %v783
        %v785 = vrcp.pop %v658
        %v786 = vmul.f32 1.0, %v785
        %v787 = vrcp.pop %v660
        %v788 = vmul.f32 1.0, %v787
        %v789 = vrcp.pop %v662
        %v790 = vmul.f32 1.0, %v789
        %v791 = vrcp.pop %v664
        %v792 = vmul.f32 1.0, %v791
        %v793 = vrcp.pop %v666
        %v794 = vmul.f32 1.0, %v793
        %v795 = vrcp.pop %v668
        %v796 = vmul.f32 1.0, %v795
        %v797 = vrcp.pop %v670
        %v798 = vmul.f32 1.0, %v797
        %v799 = vrcp.pop %v672
        %v800 = vmul.f32 1.0, %v799
        %v801 = vrcp.pop %v674
        %v802 = vmul.f32 1.0, %v801
        %v803 = vrcp.pop %v676
        %v804 = vmul.f32 1.0, %v803
        %v805 = vrcp.pop %v678
        %v806 = vmul.f32 1.0, %v805
        %v807 = vrcp.pop %v680
        %v808 = vmul.f32 1.0, %v807
        %v809 = vrcp.pop %v682
        %v810 = vmul.f32 1.0, %v809
        %v811 = vrcp.pop %v684
        %v812 = vmul.f32 1.0, %v811
        %v813 = vrcp.pop %v686
        %v814 = vmul.f32 1.0, %v813
        %v815 = vrcp.pop %v688
        %v816 = vmul.f32 1.0, %v815
        %v817 = vrcp.pop %v690
        %v818 = vmul.f32 1.0, %v817
        %v819 = vrcp.pop %v692
        %v820 = vmul.f32 1.0, %v819
        %v821 = vrcp.pop %v694
        %v822 = vmul.f32 1.0, %v821
        %v823 = vrcp.pop %v696
        %v824 = vmul.f32 1.0, %v823
        %v825 = vrcp.pop %v698
        %v826 = vmul.f32 1.0, %v825
        %v827 = vrcp.pop %v700
        %v828 = vmul.f32 1.0, %v827
        %v829 = vrcp.pop %v702
        %v830 = vmul.f32 1.0, %v829
        %v831 = vrcp.pop %v704
        %v832 = vmul.f32 1.0, %v831
        %v833 = vrcp.pop %v706
        %v834 = vmul.f32 1.0, %v833
        %v835 = vrcp.pop %v708
        %v836 = vmul.f32 1.0, %v835
        %v837 = vrcp.pop %v710
        %v838 = vmul.f32 1.0, %v837
        %v839 = vrcp.pop %v712
        %v840 = vmul.f32 1.0, %v839
        %v841 = vrcp.pop %v714
        %v842 = vmul.f32 1.0, %v841
        %v843 = vrcp.pop %v716
        %v844 = vmul.f32 1.0, %v843
        %v845 = vrcp.pop %v718
        %v846 = vmul.f32 1.0, %v845
        %v847 = vrcp.pop %v720
        %v848 = vmul.f32 1.0, %v847
        %v849 = vrcp.pop %v722
        %v850 = vmul.f32 1.0, %v849
        %v851 = vrcp.pop %v724
        %v852 = vmul.f32 1.0, %v851
        %v853 = vrcp.pop %v726
        %v854 = vmul.f32 1.0, %v853
        %v855 = vrcp.pop %v728
        %v856 = vmul.f32 1.0, %v855
        %v857 = vrcp.pop %v730
        %v858 = vmul.f32 1.0, %v857
        %v859 = vrcp.pop %v732
        %v860 = vmul.f32 1.0, %v859
        %v861 = vrcp.pop %v734
        %v862 = vmul.f32 1.0, %v861
        %v863 = vrcp.pop %v736
        %v864 = vmul.f32 1.0, %v863
        %v865 = vrcp.pop %v738
        %v866 = vmul.f32 1.0, %v865
        %v867 = vrcp.pop %v740
        %v868 = vmul.f32 1.0, %v867
        %v869 = vrcp.pop %v742
        %v870 = vmul.f32 1.0, %v869
        %v871 = vrcp.pop %v744
        %v872 = vmul.f32 1.0, %v871
        %v873 = vrcp.pop %v746
        %v874 = vmul.f32 1.0, %v873
        %v875 = vrcp.pop %v748
        %v876 = vmul.f32 1.0, %v875
        %v877 = vrcp.pop %v750
        %v878 = vmul.f32 1.0, %v877
        %v879 = vrcp.pop %v752
        %v880 = vmul.f32 1.0, %v879
        %v881 = vrcp.pop %v754
        %v882 = vmul.f32 1.0, %v881
        %v883 = vrcp.pop %v756
        %v884 = vmul.f32 1.0, %v883
        %v885 = vrcp.pop %v758
        %v886 = vmul.f32 1.0, %v885
        %v887 = vrcp.pop %v760
        %v888 = vmul.f32 1.0, %v887
        %v889 = vrcp.pop %v762
        %v890 = vmul.f32 1.0, %v889
        %v891 = vrcp.pop %v764
        %v892 = vmul.f32 1.0, %v891
        %v893 = vrcp.pop %v766
        %v894 = vmul.f32 1.0, %v893
        %v895 = vrcp.pop %v768
        %v896 = vmul.f32 1.0, %v895
        %v897 = vrcp.pop %v770
        %v898 = vmul.f32 1.0, %v897
        %v899 = vrcp.pop %v772
        %v900 = vmul.f32 1.0, %v899
        %v901 = vrcp.pop %v774
        %v902 = vmul.f32 1.0, %v901
        %v903 = vrcp.pop %v776
        %v904 = vmul.f32 1.0, %v903
        %v905 = vrcp.pop %v778
        %v906 = vmul.f32 1.0, %v905
        %v907 = vmul.f32 %v524, %v780
        %v908 = vmul.f32 %v526, %v782
        %v909 = vmul.f32 %v528, %v784
        %v910 = vmul.f32 %v530, %v786
        %v911 = vmul.f32 %v532, %v788
        %v912 = vmul.f32 %v534, %v790
        %v913 = vmul.f32 %v536, %v792
        %v914 = vmul.f32 %v538, %v794
        %v915 = vmul.f32 %v540, %v796
        %v916 = vmul.f32 %v542, %v798
        %v917 = vmul.f32 %v544, %v800
        %v918 = vmul.f32 %v546, %v802
        %v919 = vmul.f32 %v548, %v804
        %v920 = vmul.f32 %v550, %v806
        %v921 = vmul.f32 %v552, %v808
        %v922 = vmul.f32 %v554, %v810
        %v923 = vmul.f32 %v556, %v812
        %v924 = vmul.f32 %v558, %v814
        %v925 = vmul.f32 %v560, %v816
        %v926 = vmul.f32 %v562, %v818
        %v927 = vmul.f32 %v564, %v820
        %v928 = vmul.f32 %v566, %v822
        %v929 = vmul.f32 %v568, %v824
        %v930 = vmul.f32 %v570, %v826
        %v931 = vmul.f32 %v572, %v828
        %v932 = vmul.f32 %v574, %v830
        %v933 = vmul.f32 %v576, %v832
        %v934 = vmul.f32 %v578, %v834
        %v935 = vmul.f32 %v580, %v836
        %v936 = vmul.f32 %v582, %v838
        %v937 = vmul.f32 %v584, %v840
        %v938 = vmul.f32 %v586, %v842
        %v939 = vmul.f32 %v588, %v844
        %v940 = vmul.f32 %v590, %v846
        %v941 = vmul.f32 %v592, %v848
        %v942 = vmul.f32 %v594, %v850
        %v943 = vmul.f32 %v596, %v852
        %v944 = vmul.f32 %v598, %v854
        %v945 = vmul.f32 %v600, %v856
        %v946 = vmul.f32 %v602, %v858
        %v947 = vmul.f32 %v604, %v860
        %v948 = vmul.f32 %v606, %v862
        %v949 = vmul.f32 %v608, %v864
        %v950 = vmul.f32 %v610, %v866
        %v951 = vmul.f32 %v612, %v868
        %v952 = vmul.f32 %v614, %v870
        %v953 = vmul.f32 %v616, %v872
        %v954 = vmul.f32 %v618, %v874
        %v955 = vmul.f32 %v620, %v876
        %v956 = vmul.f32 %v622, %v878
        %v957 = vmul.f32 %v624, %v880
        %v958 = vmul.f32 %v626, %v882
        %v959 = vmul.f32 %v628, %v884
        %v960 = vmul.f32 %v630, %v886
        %v961 = vmul.f32 %v632, %v888
        %v962 = vmul.f32 %v634, %v890
        %v963 = vmul.f32 %v636, %v892
        %v964 = vmul.f32 %v638, %v894
        %v965 = vmul.f32 %v640, %v896
        %v966 = vmul.f32 %v642, %v898
        %v967 = vmul.f32 %v644, %v900
        %v968 = vmul.f32 %v646, %v902
        %v969 = vmul.f32 %v648, %v904
        %v970 = vmul.f32 %v650, %v906
        %971 = vst [vmem:[%s190] sm:$0xff] %v907
        %972 = vst [vmem:[%s190 + $0x8] sm:$0xff] %v908
        %973 = vst [vmem:[%s190 + $0x10] sm:$0xff] %v909
        %974 = vst [vmem:[%s190 + $0x18] sm:$0xff] %v910
        %975 = vst [vmem:[%s190 + $0x20] sm:$0xff] %v911
        %976 = vst [vmem:[%s190 + $0x28] sm:$0xff] %v912
        %977 = vst [vmem:[%s190 + $0x30] sm:$0xff] %v913
        %978 = vst [vmem:[%s190 + $0x38] sm:$0xff] %v914
        %979 = vst [vmem:[%s190 + $0x40] sm:$0xff] %v915
        %980 = vst [vmem:[%s190 + $0x48] sm:$0xff] %v916
        %981 = vst [vmem:[%s190 + $0x50] sm:$0xff] %v917
        %982 = vst [vmem:[%s190 + $0x58] sm:$0xff] %v918
        %983 = vst [vmem:[%s190 + $0x60] sm:$0xff] %v919
        %984 = vst [vmem:[%s190 + $0x68] sm:$0xff] %v920
        %985 = vst [vmem:[%s190 + $0x70] sm:$0xff] %v921
        %986 = vst [vmem:[%s190 + $0x78] sm:$0xff] %v922
        %987 = vst [vmem:[%s190 + $0x80] sm:$0xff] %v923
        %988 = vst [vmem:[%s190 + $0x88] sm:$0xff] %v924
        %989 = vst [vmem:[%s190 + $0x90] sm:$0xff] %v925
        %990 = vst [vmem:[%s190 + $0x98] sm:$0xff] %v926
        %991 = vst [vmem:[%s190 + $0xa0] sm:$0xff] %v927
        %992 = vst [vmem:[%s190 + $0xa8] sm:$0xff] %v928
        %993 = vst [vmem:[%s190 + $0xb0] sm:$0xff] %v929
        %994 = vst [vmem:[%s190 + $0xb8] sm:$0xff] %v930
        %995 = vst [vmem:[%s190 + $0xc0] sm:$0xff] %v931
        %996 = vst [vmem:[%s190 + $0xc8] sm:$0xff] %v932
        %997 = vst [vmem:[%s190 + $0xd0] sm:$0xff] %v933
        %998 = vst [vmem:[%s190 + $0xd8] sm:$0xff] %v934
        %999 = vst [vmem:[%s190 + $0xe0] sm:$0xff] %v935
        %1000 = vst [vmem:[%s190 + $0xe8] sm:$0xff] %v936
        %1001 = vst [vmem:[%s190 + $0xf0] sm:$0xff] %v937
        %1002 = vst [vmem:[%s190 + $0xf8] sm:$0xff] %v938
        %1003 = vst [vmem:[%s190 + $0x100] sm:$0xff] %v939
        %1004 = vst [vmem:[%s190 + $0x108] sm:$0xff] %v940
        %1005 = vst [vmem:[%s190 + $0x110] sm:$0xff] %v941
        %1006 = vst [vmem:[%s190 + $0x118] sm:$0xff] %v942
        %1007 = vst [vmem:[%s190 + $0x120] sm:$0xff] %v943
        %1008 = vst [vmem:[%s190 + $0x128] sm:$0xff] %v944
        %1009 = vst [vmem:[%s190 + $0x130] sm:$0xff] %v945
        %1010 = vst [vmem:[%s190 + $0x138] sm:$0xff] %v946
        %1011 = vst [vmem:[%s190 + $0x140] sm:$0xff] %v947
        %1012 = vst [vmem:[%s190 + $0x148] sm:$0xff] %v948
        %1013 = vst [vmem:[%s190 + $0x150] sm:$0xff] %v949
        %1014 = vst [vmem:[%s190 + $0x158] sm:$0xff] %v950
        %1015 = vst [vmem:[%s190 + $0x160] sm:$0xff] %v951
        %1016 = vst [vmem:[%s190 + $0x168] sm:$0xff] %v952
        %1017 = vst [vmem:[%s190 + $0x170] sm:$0xff] %v953
        %1018 = vst [vmem:[%s190 + $0x178] sm:$0xff] %v954
        %1019 = vst [vmem:[%s190 + $0x180] sm:$0xff] %v955
        %1020 = vst [vmem:[%s190 + $0x188] sm:$0xff] %v956
        %1021 = vst [vmem:[%s190 + $0x190] sm:$0xff] %v957
        %1022 = vst [vmem:[%s190 + $0x198] sm:$0xff] %v958
        %1023 = vst [vmem:[%s190 + $0x1a0] sm:$0xff] %v959
        %1024 = vst [vmem:[%s190 + $0x1a8] sm:$0xff] %v960
        %1025 = vst [vmem:[%s190 + $0x1b0] sm:$0xff] %v961
        %1026 = vst [vmem:[%s190 + $0x1b8] sm:$0xff] %v962
        %1027 = vst [vmem:[%s190 + $0x1c0] sm:$0xff] %v963
        %1028 = vst [vmem:[%s190 + $0x1c8] sm:$0xff] %v964
        %1029 = vst [vmem:[%s190 + $0x1d0] sm:$0xff] %v965
        %1030 = vst [vmem:[%s190 + $0x1d8] sm:$0xff] %v966
        %1031 = vst [vmem:[%s190 + $0x1e0] sm:$0xff] %v967
        %1032 = vst [vmem:[%s190 + $0x1e8] sm:$0xff] %v968
        %1033 = vst [vmem:[%s190 + $0x1f0] sm:$0xff] %v969
        %1034 = vst [vmem:[%s190 + $0x1f8] sm:$0xff] %v970
        %s1035 = sand.u32 %s95, 1
        %s1036 = scalar_lea.sflag [#allocation4], %s1035
        %s1037 = sand.u32 %s95, 1
        %s1038 = smul.addr %s1037, 512
        %s1039 = scalar_lea.vmem [#allocation5], %s1038
        // Predicated region
        $region33: #{tpu_custom_call.1} parent=27 // pred_check
          %p1040 = pneg %p105
        $region34: #{tpu_custom_call.1} parent=27 // pred_check_branch
          %1042 = sbr.rel (%p1040) target = $region36
        $region35: #{tpu_custom_call.1} parent=27 // pred_region
          %s1043 = smul.u32 64, %s24
          %s1045 = ssub.s32 8192, 8192
          %1046 = vsyncadd %s1036, %s1045
          %s1047 = smul.addr %s23, 64
          %s1048 = sadd.s32 %s1043, %s1047
          %s1049 = smul.addr %s1048, 128
          %s1050 = scalar_lea.hbm %s2, %s1049
          %s1051 = sshll.u32 %s1039, 4
          %s1052 = int_to_ptr.vmem [resolvable:$true] %s1051
          %1057 = dma.vmem_to_hbm [thread:$0]  %s1052, 8192, %s1050, %s1036, 128, 128, 8
        $region36: #{tpu_custom_call.1} parent=27 // pred_fallthru
          _
      $region28: #{tpu_custom_call.1} parent=5 // pred_fallthru
        _
      %p1058 = scmp.le.s32.totalorder 2, %s14
      // Predicated region
      $region37: #{tpu_custom_call.1} parent=5 // pred_check
        %p1059 = pneg %p1058
      $region38: #{tpu_custom_call.1} parent=5 // pred_check_branch
        %1061 = sbr.rel (%p1059) target = $region40
      $region39: #{tpu_custom_call.1} parent=5 // pred_region
        %s1062 = ssub.s32 %s14, 2
        // Predicated region
        $region41: #{tpu_custom_call.1} parent=39 // pred_check
          %p1063 = pneg %p111
        $region42: #{tpu_custom_call.1} parent=39 // pred_check_branch
          %1065 = sbr.rel (%p1063) target = $region44
        $region43: #{tpu_custom_call.1} parent=39 // pred_region
          %s1066 = sand.u32 %s96, 1
          %s1067 = scalar_lea.sflag [#allocation4], %s1066
          %s1068 = sand.u32 %s96, 1
          %s1069 = smul.addr %s1068, 512
          %s1070 = scalar_lea.vmem [#allocation5], %s1069
          %1071 = dma.done %s1067, 8192
        $region44: #{tpu_custom_call.1} parent=39 // pred_fallthru
          _
      $region40: #{tpu_custom_call.1} parent=5 // pred_fallthru
        _
    $region6: #{tpu_custom_call.1} parent=1 // loop_footer
      %s18 = sadd.s32 1, %s14
    $region7: #{tpu_custom_call.1} parent=1 // loop_footer_branch
      %13 = sbr.rel target = $region3
    $region8: #{tpu_custom_call.1} parent=1 // loop_exit
      _
    %1072 = vsyncpa [#allocation3], 1
    %s1073 = scalar_lea.sflag [#allocation3], 1
    %1074 = vsyncpa %s1073, 1
    %1075 = vsyncpa [#allocation4], 1
    %s1076 = scalar_lea.sflag [#allocation4], 1
    %1077 = vsyncpa %s1076, 1

</llo_original>
